<compile_context>
chip_gen: v5e
topology: v5e:2x2
jax: 0.10.0
libtpu: 0.0.40
codegen_flags: <defaults>
</compile_context>

<pallas_src>
import functools
import math

import jax
import jax.numpy as jnp
from jax import lax
from jax.experimental import pallas as pl
from jax.experimental.pallas import tpu as pltpu
import numpy as np


# ----------------------------------------------------------------------------- helpers

def _round_up(x, m):
    return ((x + m - 1) // m) * m


def _pad_rows(a, m_pad, axis):
    m = a.shape[axis]
    if m_pad == m:
        return a
    pad = [(0, 0)] * a.ndim
    pad[axis] = (0, m_pad - m)
    return jnp.pad(a, pad)


# ----------------------------------------------------------------------------- Pallas kernels

def _linear_kernel(x_ref, w_ref, b_ref, o_ref, *, relu, cast_bf16):
    x = x_ref[...]
    if cast_bf16:
        x = x.astype(jnp.bfloat16)
    y = jnp.dot(x, w_ref[...], preferred_element_type=jnp.float32) + b_ref[...]
    if relu:
        y = jnp.maximum(y, 0.0)
    o_ref[...] = y.astype(o_ref.dtype)


def pallas_linear(x2d, w, b, relu=False):
    """x2d: [M, Cin], w: [Cin, Cout], b: [Cout] -> [M, Cout] (optionally fused ReLU).

    Tiled over rows with TM up to 512 (multiple of 8); non-divisible M is zero-padded and the
    padded rows are sliced off (never a single unpipelined TM=M block for large, odd M).
    """
    M, Cin = x2d.shape
    Cout = w.shape[1]
    TM_TARGET = 512                       # small enough for v7x's 64 MiB VMEM even at Cin=Cout=512
    TM = _round_up(max(M, 1), 8) if M <= TM_TARGET else TM_TARGET
    M_pad = _round_up(M, TM)
    xp = _pad_rows(x2d, M_pad, 0)

    # bf16 operands for the MXU (f32 accumulate); keep tiny Cin=3 projections in f32.
    use_bf16 = Cin >= 8
    w_in = w.astype(jnp.bfloat16) if use_bf16 else w

    kernel = functools.partial(_linear_kernel, relu=relu, cast_bf16=use_bf16)
    out = pl.pallas_call(
        kernel,
        out_shape=jax.ShapeDtypeStruct((M_pad, Cout), jnp.float32),
        grid=(M_pad // TM,),
        in_specs=[
            pl.BlockSpec((TM, Cin), lambda i: (i, 0)),
            pl.BlockSpec((Cin, Cout), lambda i: (0, 0)),
            pl.BlockSpec((1, Cout), lambda i: (0, 0)),
        ],
        out_specs=pl.BlockSpec((TM, Cout), lambda i: (i, 0)),
        compiler_params=pltpu.CompilerParams(dimension_semantics=("parallel",)),
    )(xp, w_in, b.reshape(1, Cout))
    return out[:M] if M_pad != M else out


def linear_nd(x, lin, relu=False):
    """Apply a (folded) linear over the last axis of an N-D tensor via the Pallas kernel."""
    shp = x.shape
    y = pallas_linear(x.reshape(-1, shp[-1]), lin["w"], lin["b"], relu=relu)
    return y.reshape(shp[:-1] + (lin["w"].shape[1],))


def _fused_attn_kernel(qk_ref, v_ref, d_ref,
                       wd1_ref, bd1_ref, wd2_ref, bd2_ref,
                       wg1_ref, bg1_ref, wg2_ref, bg2_ref,
                       o_ref, *, scale):
    """Fused: pos_enc = fc_delta(delta); logits = fc_gamma(qk_diff + pos_enc);
    softmax over K; out = sum_k softmax * (v + pos_enc).  Blocks are [K, TM, F] so all
    K-reductions are unrolled elementwise VPU ops on dense (TM, F) tiles."""
    K = qk_ref.shape[0]
    wd1, bd1 = wd1_ref[...], bd1_ref[...]
    wd2, bd2 = wd2_ref[...], bd2_ref[...]
    wg1, bg1 = wg1_ref[...], bg1_ref[...]
    wg2, bg2 = wg2_ref[...], bg2_ref[...]

    pos_list, logit_list = [], []
    for k in range(K):
        d_k = d_ref[k]                                                     # (TM, 3)
        p = jnp.maximum(jnp.dot(d_k, wd1, preferred_element_type=jnp.float32) + bd1, 0.0)
        pos_k = jnp.dot(p, wd2, preferred_element_type=jnp.float32) + bd2  # (TM, F)
        g = qk_ref[k] + pos_k
        h = jnp.maximum(jnp.dot(g, wg1, preferred_element_type=jnp.float32) + bg1, 0.0)
        logit_k = (jnp.dot(h, wg2, preferred_element_type=jnp.float32) + bg2) * scale
        pos_list.append(pos_k)
        logit_list.append(logit_k)

    m = functools.reduce(jnp.maximum, logit_list)                          # K-1 VPU maxes
    exps = [jnp.exp(l - m) for l in logit_list]                            # EUP
    denom = functools.reduce(lambda a, b: a + b, exps)                     # K-1 VPU adds
    acc = None
    for k in range(K):
        contrib = exps[k] * (v_ref[k] + pos_list[k])
        acc = contrib if acc is None else acc + contrib
    o_ref[...] = (acc * pl.reciprocal(denom, approx=True)).astype(o_ref.dtype)


def fused_point_attention(qk_kmf, v_kmf, delta_kmf, fc_delta, fc_gamma, scale):
    """qk_kmf / v_kmf: [K, M, F], delta_kmf: [K, M, 3] -> [M, F]."""
    K, M, F = qk_kmf.shape
    TM = min(256, _round_up(max(M, 1), 8))        # conservative for v7x's 64 MiB VMEM
    M_pad = _round_up(M, TM)
    qk = _pad_rows(qk_kmf, M_pad, 1)
    v = _pad_rows(v_kmf, M_pad, 1)
    d = _pad_rows(delta_kmf, M_pad, 1)

    kernel = functools.partial(_fused_attn_kernel, scale=scale)
    out = pl.pallas_call(
        kernel,
        out_shape=jax.ShapeDtypeStruct((M_pad, F), jnp.float32),
        grid=(M_pad // TM,),
        in_specs=[
            pl.BlockSpec((K, TM, F), lambda i: (0, i, 0)),
            pl.BlockSpec((K, TM, F), lambda i: (0, i, 0)),
            pl.BlockSpec((K, TM, 3), lambda i: (0, i, 0)),
            pl.BlockSpec((3, F), lambda i: (0, 0)),
            pl.BlockSpec((1, F), lambda i: (0, 0)),
            pl.BlockSpec((F, F), lambda i: (0, 0)),
            pl.BlockSpec((1, F), lambda i: (0, 0)),
            pl.BlockSpec((F, F), lambda i: (0, 0)),
            pl.BlockSpec((1, F), lambda i: (0, 0)),
            pl.BlockSpec((F, F), lambda i: (0, 0)),
            pl.BlockSpec((1, F), lambda i: (0, 0)),
        ],
        out_specs=pl.BlockSpec((TM, F), lambda i: (i, 0)),
        compiler_params=pltpu.CompilerParams(dimension_semantics=("parallel",)),
    )(qk, v, d,
      fc_delta[0]["w"], fc_delta[0]["b"].reshape(1, F),
      fc_delta[1]["w"], fc_delta[1]["b"].reshape(1, F),
      fc_gamma[0]["w"], fc_gamma[0]["b"].reshape(1, F),
      fc_gamma[1]["w"], fc_gamma[1]["b"].reshape(1, F))
    return out[:M] if M_pad != M else out


def _mlp_maxpool_kernel(x_ref, w1_ref, b1_ref, w2_ref, b2_ref, o_ref):
    """Fused 2x (1x1 conv + folded BN + ReLU) then max over the neighbour axis K.
    Blocks are [K, TM, Cin]; the max is K-1 elementwise VPU maxes on (TM, Cout) tiles."""
    K = x_ref.shape[0]
    w1, b1 = w1_ref[...], b1_ref[...]
    w2, b2 = w2_ref[...], b2_ref[...]
    acc = None
    for k in range(K):
        x = x_ref[k].astype(w1.dtype)
        h = jnp.maximum(jnp.dot(x, w1, preferred_element_type=jnp.float32) + b1, 0.0)
        h = jnp.maximum(jnp.dot(h.astype(w2.dtype), w2, preferred_element_type=jnp.float32) + b2, 0.0)
        acc = h if acc is None else jnp.maximum(acc, h)
    o_ref[...] = acc.astype(o_ref.dtype)


def fused_mlp_maxpool(h_kmc, conv1, conv2):
    """h_kmc: [K, M, Cin] -> [M, Cout]  (conv1 -> relu -> conv2 -> relu -> max over K)."""
    K, M, Cin = h_kmc.shape
    Cmid = conv1["w"].shape[1]
    Cout = conv2["w"].shape[1]
    TM = min(256, _round_up(max(M, 1), 8))
    M_pad = _round_up(M, TM)
    xp = _pad_rows(h_kmc, M_pad, 1)

    out = pl.pallas_call(
        _mlp_maxpool_kernel,
        out_shape=jax.ShapeDtypeStruct((M_pad, Cout), jnp.float32),
        grid=(M_pad // TM,),
        in_specs=[
            pl.BlockSpec((K, TM, Cin), lambda i: (0, i, 0)),
            pl.BlockSpec((Cin, Cmid), lambda i: (0, 0)),
            pl.BlockSpec((1, Cmid), lambda i: (0, 0)),
            pl.BlockSpec((Cmid, Cout), lambda i: (0, 0)),
            pl.BlockSpec((1, Cout), lambda i: (0, 0)),
        ],
        out_specs=pl.BlockSpec((TM, Cout), lambda i: (i, 0)),
        compiler_params=pltpu.CompilerParams(dimension_semantics=("parallel",)),
    )(xp,
      conv1["w"].astype(jnp.bfloat16), conv1["b"].reshape(1, Cmid),
      conv2["w"].astype(jnp.bfloat16), conv2["b"].reshape(1, Cout))
    return out[:M] if M_pad != M else out


# ----------------------------------------------------------------------------- point-cloud glue

def square_distance(src, dst):
    """src [B,N,C], dst [B,M,C] -> [B,N,M] via the MXU-friendly |a|^2 + |b|^2 - 2 a.b form."""
    s2 = jnp.sum(src * src, axis=-1)[:, :, None]
    d2 = jnp.sum(dst * dst, axis=-1)[:, None, :]
    cross = jnp.einsum("bnc,bmc->bnm", src, dst)
    return jnp.maximum(s2 + d2 - 2.0 * cross, 0.0)


def knn_indices(query_xyz, base_xyz, k):
    """k nearest neighbours of each query point in base: [B,S,k] indices (and sq-dists)."""
    dists = square_distance(query_xyz, base_xyz)
    neg_vals, idx = lax.top_k(-dists, k)          # replaces O(N^2 log N) full argsort
    return idx, -neg_vals


def index_points(points, idx):
    # points [B,N,C], idx [B, ...] -> [B, ..., C]
    # TODO(synk): gathers stay as XLA take_along_axis; an in-kernel scalar-prefetch row gather
    # (PrefetchScalarGridSpec + pl.Element) would avoid materializing the K-expanded tensors.
    B = points.shape[0]
    raw = idx.shape
    idx_flat = idx.reshape(B, -1)
    g = jnp.take_along_axis(points, idx_flat[..., None], axis=1)
    return g.reshape(raw + (points.shape[-1],))


def farthest_point_sample(xyz, npoint, key):
    # TODO(synk): torch.randint seeds the first centroid nondeterministically; a fixed JAX key is used.
    B, N, _ = xyz.shape
    farthest = jax.random.randint(key, (B,), 0, N, dtype=jnp.int32)
    distance = jnp.full((B, N), 1e10, dtype=jnp.float32)
    centroids = jnp.zeros((B, npoint), dtype=jnp.int32)

    def body(i, carry):
        centroids, distance, farthest = carry
        centroids = centroids.at[:, i].set(farthest)
        centroid = xyz[jnp.arange(B), farthest][:, None, :]          # [B,1,3]
        dist = jnp.sum((xyz - centroid) ** 2, axis=-1)               # [B,N]
        distance = jnp.minimum(distance, dist)
        farthest = jnp.argmax(distance, axis=-1).astype(jnp.int32)
        return centroids, distance, farthest

    centroids, _, _ = lax.fori_loop(0, npoint, body, (centroids, distance, farthest))
    return centroids


def feature_propagate(xyz_fine, xyz_coarse, feats_coarse):
    """PointNetFeaturePropagation with empty mlp: 3-NN inverse-distance interpolation."""
    B, N, _ = xyz_fine.shape
    S = xyz_coarse.shape[1]
    if S == 1:
        return jnp.tile(feats_coarse, (1, N, 1))
    k3 = min(3, S)
    idx, d3 = knn_indices(xyz_fine, xyz_coarse, k3)                  # [B,N,3]
    dist_recip = 1.0 / (d3 + 1e-8)
    norm = jnp.sum(dist_recip, axis=2, keepdims=True)
    weight = dist_recip / norm
    gathered = index_points(feats_coarse, idx)                       # [B,N,3,D]
    return jnp.sum(gathered * weight[..., None], axis=2)


# ----------------------------------------------------------------------------- module forwards

def _to_kmf(t, M, K):
    """[B,N,K,C] -> [K, B*N, C] so K is off the lane/sublane dims inside the kernels."""
    return jnp.transpose(t.reshape(M, K, t.shape[-1]), (1, 0, 2))


def transformer_block(p, xyz, features, k):
    """TransformerBlock.forward — returns res only (attn map discarded, as in the callers)."""
    B, N, _ = xyz.shape
    d_model = p["w_qs"]["w"].shape[1]
    k_eff = min(k, N)
    M = B * N

    knn_idx, _ = knn_indices(xyz, xyz, k_eff)                        # [B,N,K]
    knn_xyz = index_points(xyz, knn_idx)                             # [B,N,K,3]

    pre = features
    x = linear_nd(features, p["fc1"])
    q = linear_nd(x, p["w_qs"])                                      # [B,N,dm]
    kk = index_points(linear_nd(x, p["w_ks"]), knn_idx)              # [B,N,K,dm]
    v = index_points(linear_nd(x, p["w_vs"]), knn_idx)               # [B,N,K,dm]

    delta = xyz[:, :, None, :] - knn_xyz                             # [B,N,K,3]
    qk_diff = q[:, :, None, :] - kk                                  # [B,N,K,dm]

    scale = float(1.0 / np.sqrt(d_model))
    # Fused kernel: fc_delta MLP + fc_gamma MLP + softmax over K + weighted sum.
    res = fused_point_attention(
        _to_kmf(qk_diff, M, k_eff),
        _to_kmf(v, M, k_eff),
        _to_kmf(delta, M, k_eff),
        p["fc_delta"], p["fc_gamma"], scale,
    ).reshape(B, N, d_model)

    res = linear_nd(res, p["fc2"]) + pre
    return res


def set_abstraction(p, xyz, points, npoint, nsample, fps_key):
    """TransitionDown / PointNetSetAbstraction (knn=True, group_all=False)."""
    B, N, C = xyz.shape
    k_eff = min(nsample, N)
    fps_idx = farthest_point_sample(xyz, npoint, fps_key)            # [B,S]
    new_xyz = index_points(xyz, fps_idx)                             # [B,S,3]
    idx, _ = knn_indices(new_xyz, xyz, k_eff)                        # [B,S,K]
    grouped_xyz = index_points(xyz, idx)                             # [B,S,K,3]
    grouped_xyz_norm = grouped_xyz - new_xyz[:, :, None, :]
    grouped_points = index_points(points, idx)                       # [B,S,K,D]
    h = jnp.concatenate([grouped_xyz_norm, grouped_points], axis=-1)  # [B,S,K,3+D]

    B_, S, K, Cin = h.shape
    assert len(p["mlp"]) == 2
    h_kmc = jnp.transpose(h.reshape(B_ * S, K, Cin), (1, 0, 2))      # [K, M, Cin]
    new_points = fused_mlp_maxpool(h_kmc, p["mlp"][0], p["mlp"][1]).reshape(B_, S, -1)
    return new_xyz, new_points


def transition_up(p, xyz1, points1, xyz2, points2):
    """TransitionUp: xyz1/points1 = coarse level, xyz2/points2 = fine level."""
    feats1 = linear_nd(points1, p["fc1"], relu=True)                 # Linear+BN1d(folded)+ReLU
    feats2 = linear_nd(points2, p["fc2"], relu=True)
    feats1_up = feature_propagate(xyz2, xyz1, feats1)                # interpolate coarse -> fine
    return feats1_up + feats2


def backbone_forward(p, x, cfg):
    xyz = x[..., :3]
    h = linear_nd(linear_nd(x, p["fc1"][0], relu=True), p["fc1"][1])
    points = transformer_block(p["transformer1"], xyz, h, cfg["nneighbor"])
    xyz_and_feats = [(xyz, points)]
    for i in range(cfg["nblocks"]):
        npoint = cfg["num_point"] // 4 ** (i + 1)
        fps_key = jax.random.fold_in(jax.random.PRNGKey(42), i)
        xyz, points = set_abstraction(p["td"][i], xyz, points, npoint, cfg["nneighbor"], fps_key)
        points = transformer_block(p["tf"][i], xyz, points, cfg["nneighbor"])
        xyz_and_feats.append((xyz, points))
    return points, xyz_and_feats


def point_transformer_seg(params, x, cfg):
    points, xyz_and_feats = backbone_forward(params["backbone"], x, cfg)
    xyz = xyz_and_feats[-1][0]

    h = linear_nd(points, params["fc2"][0], relu=True)
    h = linear_nd(h, params["fc2"][1], relu=True)
    h = linear_nd(h, params["fc2"][2])
    points = transformer_block(params["transformer2"], xyz, h, cfg["nneighbor"])

    for i in range(cfg["nblocks"]):
        points = transition_up(params["tu"][i], xyz, points,
                               xyz_and_feats[-i - 2][0], xyz_and_feats[-i - 2][1])
        xyz = xyz_and_feats[-i - 2][0]
        points = transformer_block(params["tf_up"][i], xyz, points, cfg["nneighbor"])

    h = linear_nd(points, params["fc3"][0], relu=True)
    h = linear_nd(h, params["fc3"][1], relu=True)
    return linear_nd(h, params["fc3"][2])


# ----------------------------------------------------------------------------- parameter init

def init_linear(key, cin, cout, bias=True):
    kw, kb = jax.random.split(key)
    bound = 1.0 / math.sqrt(cin)
    w = jax.random.uniform(kw, (cin, cout), jnp.float32, -bound, bound)
    b = (jax.random.uniform(kb, (cout,), jnp.float32, -bound, bound)
         if bias else jnp.zeros((cout,), jnp.float32))
    return {"w": w, "b": b}


def init_linear_bn(key, cin, cout):
    # TODO(synk): BatchNorm is folded in eval mode (running stats); training-mode batch stats not reproduced.
    lin = init_linear(key, cin, cout)
    gamma = jnp.ones((cout,), jnp.float32)
    beta = jnp.zeros((cout,), jnp.float32)
    mean = jnp.zeros((cout,), jnp.float32)
    var = jnp.ones((cout,), jnp.float32)
    eps = 1e-5
    s = gamma / jnp.sqrt(var + eps)
    return {"w": lin["w"] * s[None, :], "b": (lin["b"] - mean) * s + beta}


def init_transformer(key, d_points, d_model):
    ks = jax.random.split(key, 9)
    return {
        "fc1": init_linear(ks[0], d_points, d_model),
        "fc2": init_linear(ks[1], d_model, d_points),
        "fc_delta": [init_linear(ks[2], 3, d_model), init_linear(ks[3], d_model, d_model)],
        "fc_gamma": [init_linear(ks[4], d_model, d_model), init_linear(ks[5], d_model, d_model)],
        "w_qs": init_linear(ks[6], d_model, d_model, bias=False),
        "w_ks": init_linear(ks[7], d_model, d_model, bias=False),
        "w_vs": init_linear(ks[8], d_model, d_model, bias=False),
    }


def init_params(key, cfg):
    nb, td = cfg["nblocks"], cfg["transformer_dim"]
    keys = iter(jax.random.split(key, 64))
    bb = {
        "fc1": [init_linear(next(keys), cfg["input_dim"], 32), init_linear(next(keys), 32, 32)],
        "transformer1": init_transformer(next(keys), 32, td),
        "td": [],
        "tf": [],
    }
    for i in range(nb):
        channel = 32 * 2 ** (i + 1)
        chans = [channel // 2 + 3, channel, channel]
        mlp, last = [], chans[0]
        for out in chans[1:]:
            mlp.append(init_linear_bn(next(keys), last, out))
            last = out
        bb["td"].append({"mlp": mlp})
        bb["tf"].append(init_transformer(next(keys), channel, td))

    c_top = 32 * 2 ** nb
    params = {
        "backbone": bb,
        "fc2": [init_linear(next(keys), c_top, 512),
                init_linear(next(keys), 512, 512),
                init_linear(next(keys), 512, c_top)],
        "transformer2": init_transformer(next(keys), c_top, td),
        "tu": [],
        "tf_up": [],
        "fc3": None,
    }
    for i in reversed(range(nb)):
        channel = 32 * 2 ** i
        params["tu"].append({"fc1": init_linear_bn(next(keys), channel * 2, channel),
                             "fc2": init_linear_bn(next(keys), channel, channel)})
        params["tf_up"].append(init_transformer(next(keys), channel, td))
    params["fc3"] = [init_linear(next(keys), 32, 64),
                     init_linear(next(keys), 64, 64),
                     init_linear(next(keys), 64, cfg["num_class"])]
    return params


# ----------------------------------------------------------------------------- main

if __name__ == "__main__":
    cfg = dict(num_point=64, nblocks=2, nneighbor=4, num_class=4, input_dim=3, transformer_dim=32)

    key = jax.random.PRNGKey(0)
    pkey, xkey = jax.random.split(key)
    params = init_params(pkey, cfg)

    # x: [B, N, input_dim]  (channel-last point cloud; first 3 channels are xyz)
    x = jax.random.normal(xkey, (2, cfg["num_point"], cfg["input_dim"]), dtype=jnp.float32)

    out = point_transformer_seg(params, x, cfg)
    out = jax.block_until_ready(out)

    assert out.shape == (2, cfg["num_point"], cfg["num_class"]), out.shape
    assert bool(jnp.all(jnp.isfinite(out)))
    print("KERNEL_OK")
</pallas_src>

<mosaic_0001>
module attributes {stable_mosaic.version = 11 : i64} {
  func.func @_linear_kernel(%arg0: i32, %arg1: memref<128x3xf32, #tpu.memory_space<vmem>>, %arg2: memref<3x32xf32, #tpu.memory_space<vmem>>, %arg3: memref<1x32xf32, #tpu.memory_space<vmem>>, %arg4: memref<128x32xf32, #tpu.memory_space<vmem>>) attributes {dimension_semantics = [#tpu.dimension_semantics<parallel>], iteration_bounds = array<i64: 1>, scalar_prefetch = 0 : i64, scratch_operands = 0 : i64, tpu.core_type = #tpu.core_type<tc>, window_params = [{transform_indices = @transform_0, window_bounds = array<i64: 128, 3>}, {pipeline_mode = #tpu.pipeline_mode<synchronous>, transform_indices = @transform_1, window_bounds = array<i64: 3, 32>}, {pipeline_mode = #tpu.pipeline_mode<synchronous>, transform_indices = @transform_2, window_bounds = array<i64: 1, 32>}, {transform_indices = @transform_3, window_bounds = array<i64: 128, 32>}]} {
    %c0 = arith.constant 0 : index
    %c0_0 = arith.constant 0 : index
    %0 = vector.load %arg1[%c0, %c0_0] : memref<128x3xf32, #tpu.memory_space<vmem>>, vector<128x3xf32>
    %c0_1 = arith.constant 0 : index
    %c0_2 = arith.constant 0 : index
    %1 = vector.load %arg2[%c0_1, %c0_2] : memref<3x32xf32, #tpu.memory_space<vmem>>, vector<3x32xf32>
    %cst = arith.constant dense<0.000000e+00> : vector<128x32xf32>
    %2 = tpu.matmul %0, %1, %cst {dimension_numbers = #tpu.dot_dimension_numbers<[1], [0], [0], [1], [0, 0, 1, 1], [], []>} : vector<128x3xf32>, vector<3x32xf32>, vector<128x32xf32> -> vector<128x32xf32>
    %c0_3 = arith.constant 0 : index
    %c0_4 = arith.constant 0 : index
    %3 = vector.load %arg3[%c0_3, %c0_4] : memref<1x32xf32, #tpu.memory_space<vmem>>, vector<1x32xf32>
    %4 = vector.broadcast %3 : vector<1x32xf32> to vector<128x32xf32>
    %5 = arith.addf %2, %4 : vector<128x32xf32>
    %cst_5 = arith.constant 0.000000e+00 : f32
    %6 = vector.broadcast %cst_5 : f32 to vector<128x32xf32>
    %7 = arith.maximumf %5, %6 : vector<128x32xf32>
    %c0_6 = arith.constant 0 : index
    %c0_7 = arith.constant 0 : index
    %8 = vector.load %arg4[%c0_6, %c0_7] : memref<128x32xf32, #tpu.memory_space<vmem>>, vector<128x32xf32>
    tpu.vector_store %arg4[%c0_6, %c0_7], %7 {strides = array<i32>} : memref<128x32xf32, #tpu.memory_space<vmem>>, vector<128x32xf32>,
    return
  }
  func.func @transform_0(%arg0: i32) -> (i32, i32) {
    %c0_i32 = arith.constant 0 : i32
    %c0_i32_0 = arith.constant 0 : i32
    return %arg0, %c0_i32 : i32, i32
  }
  func.func @transform_1(%arg0: i32) -> (i32, i32) {
    %c0_i32 = arith.constant 0 : i32
    %c0_i32_0 = arith.constant 0 : i32
    %c0_i32_1 = arith.constant 0 : i32
    return %c0_i32, %c0_i32_0 : i32, i32
  }
  func.func @transform_2(%arg0: i32) -> (i32, i32) {
    %c0_i32 = arith.constant 0 : i32
    %c0_i32_0 = arith.constant 0 : i32
    %c0_i32_1 = arith.constant 0 : i32
    return %c0_i32, %c0_i32_0 : i32, i32
  }
  func.func @transform_3(%arg0: i32) -> (i32, i32) {
    %c0_i32 = arith.constant 0 : i32
    %c0_i32_0 = arith.constant 0 : i32
    return %arg0, %c0_i32 : i32, i32
  }
}

</mosaic_0001>

<llo_original>
// kernel: tpu_custom_call.1
$region0: #{tpu_custom_call.1}
  #allocation0 [shape = 'u32[]', space=smem, size = 0x4, offset = 0x4, fixed_abs, tag = 'smem constant byte address 0x4 - core index']
  #allocation1 [shape = 'u32[72,128]{1,0:T(1,128)}', space=vmem, size = 0x9000, scoped, tag = 'internal scratch']
  %s0 = inlined_call_operand.vmem [shape: f32[128,3], index: 0, kind: input, shape index: {}]
  %s1 = inlined_call_operand.vmem [shape: f32[3,32], index: 1, kind: input, shape index: {}]
  %s2 = inlined_call_operand.vmem [shape: f32[1,32], index: 2, kind: input, shape index: {}]
  %s3 = inlined_call_operand.vmem [shape: f32[128,32], index: 3, kind: output, shape index: {}]
  %s4 = sld [smem:[#allocation0]]
  $region22: #{tpu_custom_call.1} parent=0
    _
  %s6 = ssub.s32 1, %s4
  %s7 = scalar_select 0, %s6, %s4
  // Predicated region
  $region2: #{tpu_custom_call.1} parent=0 // pred_check
    _
  $region3: #{tpu_custom_call.1} parent=0 // pred_check_branch
    %9 = sbr.rel (0) target = $region5
  $region4: #{tpu_custom_call.1} parent=0 // pred_region
    _
  $region5: #{tpu_custom_call.1} parent=0 // pred_fallthru
    _
  // Predicated region
  $region6: #{tpu_custom_call.1} parent=0 // pred_check
    _
  $region7: #{tpu_custom_call.1} parent=0 // pred_check_branch
    %11 = sbr.rel (0) target = $region9
  $region8: #{tpu_custom_call.1} parent=0 // pred_region
    _
  $region9: #{tpu_custom_call.1} parent=0 // pred_fallthru
    _
  // Predicated region
  $region10: #{tpu_custom_call.1} parent=0 // pred_check
    _
  $region11: #{tpu_custom_call.1} parent=0 // pred_check_branch
    %13 = sbr.rel (0) target = $region13
  $region12: #{tpu_custom_call.1} parent=0 // pred_region
    _
  $region13: #{tpu_custom_call.1} parent=0 // pred_fallthru
    _
  %v14 = vld [vmem:[%s0] sm:$0xff]
  %v15 = vld [vmem:[%s0 + $0x8] sm:$0xff]
  %v16 = vld [vmem:[%s0 + $0x10] sm:$0xff]
  %v17 = vld [vmem:[%s0 + $0x18] sm:$0xff]
  %v18 = vld [vmem:[%s0 + $0x20] sm:$0xff]
  %v19 = vld [vmem:[%s0 + $0x28] sm:$0xff]
  %v20 = vld [vmem:[%s0 + $0x30] sm:$0xff]
  %v21 = vld [vmem:[%s0 + $0x38] sm:$0xff]
  %v22 = vld [vmem:[%s0 + $0x40] sm:$0xff]
  %v23 = vld [vmem:[%s0 + $0x48] sm:$0xff]
  %v24 = vld [vmem:[%s0 + $0x50] sm:$0xff]
  %v25 = vld [vmem:[%s0 + $0x58] sm:$0xff]
  %v26 = vld [vmem:[%s0 + $0x60] sm:$0xff]
  %v27 = vld [vmem:[%s0 + $0x68] sm:$0xff]
  %v28 = vld [vmem:[%s0 + $0x70] sm:$0xff]
  %v29 = vld [vmem:[%s0 + $0x78] sm:$0xff]
  %v30 = vld [vmem:[%s1] sm:$0x7]
  %v31 = vld [vmem:[%s2] sm:$0x1]
  %v33 = vperm.slane %v31, 0
  %vm35 = vcmask 23552
  %v37 = vsel %vm35, %v14, 0
  %v40 = vsel %vm35, %v15, 0
  %v43 = vsel %vm35, %v16, 0
  %v46 = vsel %vm35, %v17, 0
  %v49 = vsel %vm35, %v18, 0
  %v52 = vsel %vm35, %v19, 0
  %v55 = vsel %vm35, %v20, 0
  %v58 = vsel %vm35, %v21, 0
  %v61 = vsel %vm35, %v22, 0
  %v64 = vsel %vm35, %v23, 0
  %v67 = vsel %vm35, %v24, 0
  %v70 = vsel %vm35, %v25, 0
  %v73 = vsel %vm35, %v26, 0
  %v76 = vsel %vm35, %v27, 0
  %v79 = vsel %vm35, %v28, 0
  %v82 = vsel %vm35, %v29, 0
  %vm84 = vcmask 1042432
  %v86 = vsel %vm84, %v30, 0
  %88 = vmatpush.msra.mxu0 0.0
  %89 = vmatpush.msra.mxu0 0.0
  %90 = vmatpush.msra.mxu0 0.0
  %91 = vmatpush.msra.mxu0 0.0
  %92 = vmatpush.msra.mxu0 0.0
  %93 = vmatpush.msra.mxu0 0.0
  %94 = vmatpush.msra.mxu0 0.0
  %95 = vmatpush.msra.mxu0 0.0
  %96 = vmatpush.msra.mxu0 0.0
  %97 = vmatpush.msra.mxu0 0.0
  %98 = vmatpush.msra.mxu0 0.0
  %99 = vmatpush.msra.mxu0 0.0
  %100 = vmatpush.msra.mxu0 0.0
  %101 = vmatpush.msra.mxu0 0.0
  %102 = vmatpush.msra.mxu0 0.0
  %103 = vmatpush.msra.mxu0 %v86
  %104 = vmatmul.f32.gmra.mxu0 %v37
  %v105 = vpop.f32.mrf.mxu0
  %v106 = vadd.f32 %v33, %v105
  %107 = vmatmul.f32.gmra.mxu0 %v40
  %v108 = vpop.f32.mrf.mxu0
  %v109 = vadd.f32 %v33, %v108
  %110 = vmatmul.f32.gmra.mxu0 %v43
  %v111 = vpop.f32.mrf.mxu0
  %v112 = vadd.f32 %v33, %v111
  %113 = vmatmul.f32.gmra.mxu0 %v46
  %v114 = vpop.f32.mrf.mxu0
  %v115 = vadd.f32 %v33, %v114
  %116 = vmatmul.f32.gmra.mxu0 %v49
  %v117 = vpop.f32.mrf.mxu0
  %v118 = vadd.f32 %v33, %v117
  %119 = vmatmul.f32.gmra.mxu0 %v52
  %v120 = vpop.f32.mrf.mxu0
  %v121 = vadd.f32 %v33, %v120
  %122 = vmatmul.f32.gmra.mxu0 %v55
  %v123 = vpop.f32.mrf.mxu0
  %v124 = vadd.f32 %v33, %v123
  %125 = vmatmul.f32.gmra.mxu0 %v58
  %v126 = vpop.f32.mrf.mxu0
  %v127 = vadd.f32 %v33, %v126
  %128 = vmatmul.f32.gmra.mxu0 %v61
  %v129 = vpop.f32.mrf.mxu0
  %v130 = vadd.f32 %v33, %v129
  %131 = vmatmul.f32.gmra.mxu0 %v64
  %v132 = vpop.f32.mrf.mxu0
  %v133 = vadd.f32 %v33, %v132
  %134 = vmatmul.f32.gmra.mxu0 %v67
  %v135 = vpop.f32.mrf.mxu0
  %v136 = vadd.f32 %v33, %v135
  %137 = vmatmul.f32.gmra.mxu0 %v70
  %v138 = vpop.f32.mrf.mxu0
  %v139 = vadd.f32 %v33, %v138
  %140 = vmatmul.f32.gmra.mxu0 %v73
  %v141 = vpop.f32.mrf.mxu0
  %v142 = vadd.f32 %v33, %v141
  %143 = vmatmul.f32.gmra.mxu0 %v76
  %v144 = vpop.f32.mrf.mxu0
  %v145 = vadd.f32 %v33, %v144
  %146 = vmatmul.f32.gmra.mxu0 %v79
  %v147 = vpop.f32.mrf.mxu0
  %v148 = vadd.f32 %v33, %v147
  %149 = vmatmul.f32.gmra.mxu0 %v82
  %v150 = vpop.f32.mrf.mxu0
  %v151 = vadd.f32 %v33, %v150
  %152 = vdwg.mxu0
  %v153 = vmax.f32 %v106, 0.0
  %v154 = vmax.f32 %v109, 0.0
  %v155 = vmax.f32 %v112, 0.0
  %v156 = vmax.f32 %v115, 0.0
  %v157 = vmax.f32 %v118, 0.0
  %v158 = vmax.f32 %v121, 0.0
  %v159 = vmax.f32 %v124, 0.0
  %v160 = vmax.f32 %v127, 0.0
  %v161 = vmax.f32 %v130, 0.0
  %v162 = vmax.f32 %v133, 0.0
  %v163 = vmax.f32 %v136, 0.0
  %v164 = vmax.f32 %v139, 0.0
  %v165 = vmax.f32 %v142, 0.0
  %v166 = vmax.f32 %v145, 0.0
  %v167 = vmax.f32 %v148, 0.0
  %v168 = vmax.f32 %v151, 0.0
  %vm169 = vcmask 261120
  %170 = vst.msk [vmem:[%s3] sm:$0xff] %vm169, %v153
  %171 = vst.msk [vmem:[%s3 + $0x8] sm:$0xff] %vm169, %v154
  %172 = vst.msk [vmem:[%s3 + $0x10] sm:$0xff] %vm169, %v155
  %173 = vst.msk [vmem:[%s3 + $0x18] sm:$0xff] %vm169, %v156
  %174 = vst.msk [vmem:[%s3 + $0x20] sm:$0xff] %vm169, %v157
  %175 = vst.msk [vmem:[%s3 + $0x28] sm:$0xff] %vm169, %v158
  %176 = vst.msk [vmem:[%s3 + $0x30] sm:$0xff] %vm169, %v159
  %177 = vst.msk [vmem:[%s3 + $0x38] sm:$0xff] %vm169, %v160
  %178 = vst.msk [vmem:[%s3 + $0x40] sm:$0xff] %vm169, %v161
  %179 = vst.msk [vmem:[%s3 + $0x48] sm:$0xff] %vm169, %v162
  %180 = vst.msk [vmem:[%s3 + $0x50] sm:$0xff] %vm169, %v163
  %181 = vst.msk [vmem:[%s3 + $0x58] sm:$0xff] %vm169, %v164
  %182 = vst.msk [vmem:[%s3 + $0x60] sm:$0xff] %vm169, %v165
  %183 = vst.msk [vmem:[%s3 + $0x68] sm:$0xff] %vm169, %v166
  %184 = vst.msk [vmem:[%s3 + $0x70] sm:$0xff] %vm169, %v167
  %185 = vst.msk [vmem:[%s3 + $0x78] sm:$0xff] %vm169, %v168
  // Predicated region
  $region14: #{tpu_custom_call.1} parent=0 // pred_check
    _
  $region15: #{tpu_custom_call.1} parent=0 // pred_check_branch
    %187 = sbr.rel (0) target = $region17
  $region16: #{tpu_custom_call.1} parent=0 // pred_region
    _
  $region17: #{tpu_custom_call.1} parent=0 // pred_fallthru
    _
  // Predicated region
  $region18: #{tpu_custom_call.1} parent=0 // pred_check
    _
  $region19: #{tpu_custom_call.1} parent=0 // pred_check_branch
    %189 = sbr.rel (0) target = $region21
  $region20: #{tpu_custom_call.1} parent=0 // pred_region
    _
  $region21: #{tpu_custom_call.1} parent=0 // pred_fallthru
    _

</llo_original>
